<compile_context>
chip_gen: v6e
topology: v6e:2x2x1
jax: 0.10.0
libtpu: 0.0.40
codegen_flags: <defaults>
</compile_context>

<pallas_src>
import math

import numpy as np

import jax
import jax.numpy as jnp
from jax.experimental import pallas as pl
from jax.experimental.pallas import tpu as pltpu

# ---- static problem configuration (small, consistent with the module) -------
B = 2
DIM_IN = 4
DIM_OUT = 8          # must be divisible by 4 (GroupNorm groups in __init__)
H = W = 16
HW = H * W           # 256
L = B * HW           # 512 -- batch folded onto the 128-lane axis
RATE = 1
DILS = (6 * RATE, 12 * RATE, 18 * RATE)
BN_EPS = 1e-5
CIN_PAD = 8          # pad Cin 4 -> 8 so every im2col block is sublane-tile aligned


def _kept_shifts():
    """Unique nonzero (dy, dx) 3x3-tap offsets that overlap an HxW image."""
    shifts = []
    for d in DILS:
        for ky in range(3):
            for kx in range(3):
                dy, dx = (ky - 1) * d, (kx - 1) * d
                if dy == 0 and dx == 0:
                    continue
                has_y = max(0, -dy) < min(H, H - dy)   # some valid output row
                has_x = max(0, -dx) < min(W, W - dx)   # some valid output col
                if has_y and has_x and (dy, dx) not in shifts:
                    shifts.append((dy, dx))
    return tuple(shifts)


SHIFTS = _kept_shifts()            # 16 shifts (dilation-18 off-center taps die)
N_BLOCKS = 1 + len(SHIFTS) + 1     # [x | shifted taps | global-mean block]
K_ALL = N_BLOCKS * CIN_PAD         # 144 -- contraction size of the fused matmul


# ----------------------------- Pallas kernel --------------------------------
def _aspp_kernel(x_ref, masks_ref, segs_ref, wall_ref, ball_ref,
                 wct_ref, bc_ref, out_ref):
    x = x_ref[...]                                         # (CIN_PAD, L) f32

    # im2col on the lane axis: x itself (1x1 branch + all center taps), one
    # masked XLU lane-roll per kept dilated-conv tap, then the per-image
    # global-mean block (branch5; align_corners bilinear upsample of a 1x1
    # map == exact broadcast).
    blocks = [x]
    for j, (dy, dx) in enumerate(SHIFTS):
        off = dy * W + dx
        shifted = pltpu.roll(x, (-off) % L, axis=1)        # XLU rotation
        blocks.append(shifted * masks_ref[pl.ds(j, 1), :])  # precomputed mask

    # branch5: mean over each image's own 256-lane segment, broadcast back.
    inv_hw = np.float32(1.0 / HW)
    gblock = None
    for b in range(B):
        seg = segs_ref[pl.ds(b, 1), :]                          # (1, L)
        s = jnp.sum(x * seg, axis=1, keepdims=True) * inv_hw    # (CIN_PAD, 1)
        part = s * seg                                          # (CIN_PAD, L)
        gblock = part if gblock is None else gblock + part
    blocks.append(gblock)

    # every block is exactly CIN_PAD=8 sublanes -> tile-aligned, pure layout
    patches = jnp.concatenate(blocks, axis=0)              # (K_ALL, L)

    # branches 1..5 (conv + folded BN + relu) in a single MXU pass
    stack = jnp.maximum(
        jnp.dot(wall_ref[...], patches, preferred_element_type=jnp.float32)
        + ball_ref[...],
        0.0)                                               # (5*Cout, L)

    # conv_cat (1x1 over the 5*Cout concat) fused into one matmul
    out = (jnp.dot(wct_ref[...], stack, preferred_element_type=jnp.float32)
           + bc_ref[...])
    out_ref[...] = jnp.maximum(out, 0.0)                   # lane-dense store


def _full_spec(shape):
    n = len(shape)
    return pl.BlockSpec(shape, lambda i, n=n: (0,) * n)


@jax.jit
def aspp_forward(x_nchw, kparams):
    """x_nchw: (B, Cin, H, W) float32 -> (B, Cout, H, W) float32."""
    masks, segs, w_all, b_all, wc_t, bc = kparams

    # wrapper-side layout plumbing (tiny XLA ops, fused under jit):
    # NCHW -> (Cin, B*HW), zero-pad channels to CIN_PAD for tile alignment.
    x = x_nchw.astype(jnp.float32).reshape(B, DIM_IN, HW)
    x = jnp.transpose(x, (1, 0, 2)).reshape(DIM_IN, L)
    x = jnp.concatenate(
        [x, jnp.zeros((CIN_PAD - DIM_IN, L), jnp.float32)], axis=0)

    out_flat = pl.pallas_call(
        _aspp_kernel,
        out_shape=jax.ShapeDtypeStruct((DIM_OUT, L), jnp.float32),
        grid_spec=pltpu.PrefetchScalarGridSpec(
            num_scalar_prefetch=0,
            grid=(1,),                      # single invocation, batch folded
            in_specs=[
                _full_spec((CIN_PAD, L)),
                _full_spec(masks.shape),
                _full_spec(segs.shape),
                _full_spec(w_all.shape),
                _full_spec(b_all.shape),
                _full_spec(wc_t.shape),
                _full_spec(bc.shape),
            ],
            out_specs=_full_spec((DIM_OUT, L)),
        ),
        compiler_params=pltpu.CompilerParams(
            dimension_semantics=("arbitrary",)),
    )(x, masks, segs, w_all, b_all, wc_t, bc)

    out = out_flat.reshape(DIM_OUT, B, HW)
    out = jnp.transpose(out, (1, 0, 2)).reshape(B, DIM_OUT, H, W)
    return out


# ------------------------ constant mask construction ------------------------
def _build_masks_and_segs():
    yy, xx = np.meshgrid(np.arange(H), np.arange(W), indexing="ij")
    yy = yy.reshape(-1)
    xx = xx.reshape(-1)
    p = np.arange(HW)
    rows = []
    for dy, dx in SHIFTS:
        off = dy * W + dx
        valid = ((yy + dy >= 0) & (yy + dy < H) &
                 (xx + dx >= 0) & (xx + dx < W))
        # trace-time invariant: every VALID output position reads a source lane
        # inside its own HW image segment, so the full-L cyclic roll never
        # feeds wrapped / cross-batch lanes to an unmasked position.
        src = p + off
        assert np.all((src[valid] >= 0) & (src[valid] < HW)), (dy, dx)
        rows.append(valid.astype(np.float32))
    masks = np.tile(np.stack(rows), (1, B))        # (n_shifts, B*HW)
    segs = np.zeros((B, L), np.float32)            # per-image segment indicator
    for b in range(B):
        segs[b, b * HW:(b + 1) * HW] = 1.0
    return jnp.asarray(masks), jnp.asarray(segs)


# ------------------------ parameter construction ----------------------------
def _conv_weight(key, kh, kw, cin, cout):
    # mirrors: n = kh*kw*cout; weight ~ N(0, sqrt(2/n)); bias = 0
    std = math.sqrt(2.0 / (kh * kw * cout))
    return jax.random.normal(key, (kh, kw, cin, cout), jnp.float32) * std


def _fold_bn(w_hwio, bias, gamma, beta, mean, var):
    scale = gamma / jnp.sqrt(var + BN_EPS)
    return w_hwio * scale, (bias - mean) * scale + beta


def _pack_kernel_params(folded):
    """Pack BN-folded conv weights + masks into the 6 kernel operands.

    w_all : (5*Cout, K_ALL)  one CIN_PAD-wide column block per patch block
    b_all : (5*Cout, 1)
    wc_t  : (Cout, 5*Cout)   conv_cat weight, transposed
    bc    : (Cout, 1)
    """
    cin, cout = DIM_IN, DIM_OUT
    col = {(0, 0): 0}
    for j, s in enumerate(SHIFTS):
        col[s] = (1 + j) * CIN_PAD
    gcol = (1 + len(SHIFTS)) * CIN_PAD        # global-mean block columns

    w_all = np.zeros((5 * cout, K_ALL), np.float32)
    # branch1: 1x1 conv -> only the unshifted x block
    w_all[0:cout, 0:cin] = np.asarray(folded["w1"]).reshape(cin, cout).T
    # branches 2..4: dilated 3x3 convs, one column block per kept tap
    for bi, (name, d) in enumerate((("w2", DILS[0]),
                                    ("w3", DILS[1]),
                                    ("w4", DILS[2]))):
        w = np.asarray(folded[name])          # (3, 3, Cin, Cout)
        r0 = (bi + 1) * cout
        for ky in range(3):
            for kx in range(3):
                sh = ((ky - 1) * d, (kx - 1) * d)
                if sh not in col:             # tap never overlaps the image
                    continue
                c0 = col[sh]
                w_all[r0:r0 + cout, c0:c0 + cin] = w[ky, kx].T
    # branch5: 1x1 conv applied to the global-mean block
    w_all[4 * cout:5 * cout, gcol:gcol + cin] = (
        np.asarray(folded["w5"]).reshape(cin, cout).T)

    b_all = np.concatenate([np.asarray(folded["b%d" % i]) for i in range(1, 6)])
    wc_t = np.asarray(folded["wc"]).reshape(5 * cout, cout).T
    bc = np.asarray(folded["bc"])

    masks, segs = _build_masks_and_segs()
    return (masks, segs,
            jnp.asarray(w_all),
            jnp.asarray(b_all).reshape(5 * cout, 1),
            jnp.asarray(wc_t),
            jnp.asarray(bc).reshape(cout, 1))


def make_params(key):
    ks = jax.random.split(key, 6)
    raw = {
        "w1": _conv_weight(ks[0], 1, 1, DIM_IN, DIM_OUT),
        "w2": _conv_weight(ks[1], 3, 3, DIM_IN, DIM_OUT),
        "w3": _conv_weight(ks[2], 3, 3, DIM_IN, DIM_OUT),
        "w4": _conv_weight(ks[3], 3, 3, DIM_IN, DIM_OUT),
        "w5": _conv_weight(ks[4], 1, 1, DIM_IN, DIM_OUT),
        "wc": _conv_weight(ks[5], 1, 1, 5 * DIM_OUT, DIM_OUT),
    }
    zeros = jnp.zeros((DIM_OUT,), jnp.float32)
    ones = jnp.ones((DIM_OUT,), jnp.float32)

    folded = {}
    for name in ("w1", "w2", "w3", "w4", "w5", "wc"):
        # BN init: gamma=1, beta=0, running_mean=0, running_var=1 ; conv bias=0
        w_eff, b_eff = _fold_bn(raw[name], zeros, ones, zeros, zeros, ones)
        folded[name] = w_eff
        folded["b" + name[1:]] = b_eff

    return folded, _pack_kernel_params(folded)


# ------------------------ pure-JAX reference (for checking) -----------------
def reference(x_nchw, folded):
    x = jnp.transpose(x_nchw, (0, 2, 3, 1)).astype(jnp.float32)  # NHWC

    def conv(inp, w_hwio, bias, dil, pad):
        y = jax.lax.conv_general_dilated(
            inp, w_hwio, window_strides=(1, 1),
            padding=[(pad, pad), (pad, pad)], rhs_dilation=(dil, dil),
            dimension_numbers=("NHWC", "HWIO", "NHWC"))
        return jnp.maximum(y + bias.reshape(1, 1, 1, -1), 0.0)

    br1 = conv(x, folded["w1"], folded["b1"], 1, 0)
    br2 = conv(x, folded["w2"], folded["b2"], DILS[0], DILS[0])
    br3 = conv(x, folded["w3"], folded["b3"], DILS[1], DILS[1])
    br4 = conv(x, folded["w4"], folded["b4"], DILS[2], DILS[2])
    gm = jnp.mean(x, axis=(1, 2), keepdims=True)
    br5 = conv(gm, folded["w5"], folded["b5"], 1, 0)
    br5 = jnp.broadcast_to(br5, br1.shape)
    cat = jnp.concatenate([br1, br2, br3, br4, br5], axis=-1)
    out = conv(cat, folded["wc"], folded["bc"], 1, 0)
    return jnp.transpose(out, (0, 3, 1, 2))  # back to NCHW


# ---------------------------------- main -------------------------------------
if __name__ == "__main__":
    key = jax.random.PRNGKey(0)
    kx, kp = jax.random.split(key)

    x = jax.random.normal(kx, (B, DIM_IN, H, W), jnp.float32)  # NCHW like torch
    folded, kparams = make_params(kp)

    out = jax.block_until_ready(aspp_forward(x, kparams))

    ref = jax.block_until_ready(reference(x, folded))
    assert out.shape == (B, DIM_OUT, H, W), out.shape
    assert jnp.allclose(out, ref, rtol=1e-4, atol=1e-4), float(
        jnp.max(jnp.abs(out - ref)))

    print("KERNEL_OK")
</pallas_src>

<mosaic_0001>
module attributes {stable_mosaic.version = 11 : i64} {
  func.func @_aspp_kernel(%arg0: i32, %arg1: memref<8x512xf32, #tpu.memory_space<vmem>>, %arg2: memref<16x512xf32, #tpu.memory_space<vmem>>, %arg3: memref<2x512xf32, #tpu.memory_space<vmem>>, %arg4: memref<40x144xf32, #tpu.memory_space<vmem>>, %arg5: memref<40x1xf32, #tpu.memory_space<vmem>>, %arg6: memref<8x40xf32, #tpu.memory_space<vmem>>, %arg7: memref<8x1xf32, #tpu.memory_space<vmem>>, %arg8: memref<8x512xf32, #tpu.memory_space<vmem>>) attributes {dimension_semantics = [#tpu.dimension_semantics<arbitrary>], iteration_bounds = array<i64: 1>, scalar_prefetch = 0 : i64, scratch_operands = 0 : i64, tpu.core_type = #tpu.core_type<tc>, window_params = [{pipeline_mode = #tpu.pipeline_mode<synchronous>, transform_indices = @transform_0, window_bounds = array<i64: 8, 512>}, {pipeline_mode = #tpu.pipeline_mode<synchronous>, transform_indices = @transform_1, window_bounds = array<i64: 16, 512>}, {pipeline_mode = #tpu.pipeline_mode<synchronous>, transform_indices = @transform_2, window_bounds = array<i64: 2, 512>}, {pipeline_mode = #tpu.pipeline_mode<synchronous>, transform_indices = @transform_3, window_bounds = array<i64: 40, 144>}, {pipeline_mode = #tpu.pipeline_mode<synchronous>, transform_indices = @transform_4, window_bounds = array<i64: 40, 1>}, {pipeline_mode = #tpu.pipeline_mode<synchronous>, transform_indices = @transform_5, window_bounds = array<i64: 8, 40>}, {pipeline_mode = #tpu.pipeline_mode<synchronous>, transform_indices = @transform_6, window_bounds = array<i64: 8, 1>}, {pipeline_mode = #tpu.pipeline_mode<synchronous>, transform_indices = @transform_7, window_bounds = array<i64: 8, 512>}]} {
    %c0 = arith.constant 0 : index
    %c0_0 = arith.constant 0 : index
    %0 = vector.load %arg1[%c0, %c0_0] : memref<8x512xf32, #tpu.memory_space<vmem>>, vector<8x512xf32>
    %c102_i32 = arith.constant 102 : i32
    %1 = tpu.dynamic_rotate %0 by %c102_i32 dim 1 : vector<8x512xf32>, i32 -> vector<8x512xf32>
    %c0_1 = arith.constant 0 : index
    %c0_2 = arith.constant 0 : index
    %2 = vector.load %arg2[%c0_1, %c0_2] : memref<16x512xf32, #tpu.memory_space<vmem>>, vector<1x512xf32>
    %3 = vector.broadcast %2 : vector<1x512xf32> to vector<8x512xf32>
    %4 = arith.mulf %1, %3 : vector<8x512xf32>
    %c96_i32 = arith.constant 96 : i32
    %5 = tpu.dynamic_rotate %0 by %c96_i32 dim 1 : vector<8x512xf32>, i32 -> vector<8x512xf32>
    %c1 = arith.constant 1 : index
    %c0_3 = arith.constant 0 : index
    %6 = vector.load %arg2[%c1, %c0_3] : memref<16x512xf32, #tpu.memory_space<vmem>>, vector<1x512xf32>
    %7 = vector.broadcast %6 : vector<1x512xf32> to vector<8x512xf32>
    %8 = arith.mulf %5, %7 : vector<8x512xf32>
    %c90_i32 = arith.constant 90 : i32
    %9 = tpu.dynamic_rotate %0 by %c90_i32 dim 1 : vector<8x512xf32>, i32 -> vector<8x512xf32>
    %c2 = arith.constant 2 : index
    %c0_4 = arith.constant 0 : index
    %10 = vector.load %arg2[%c2, %c0_4] : memref<16x512xf32, #tpu.memory_space<vmem>>, vector<1x512xf32>
    %11 = vector.broadcast %10 : vector<1x512xf32> to vector<8x512xf32>
    %12 = arith.mulf %9, %11 : vector<8x512xf32>
    %c6_i32 = arith.constant 6 : i32
    %13 = tpu.dynamic_rotate %0 by %c6_i32 dim 1 : vector<8x512xf32>, i32 -> vector<8x512xf32>
    %c3 = arith.constant 3 : index
    %c0_5 = arith.constant 0 : index
    %14 = vector.load %arg2[%c3, %c0_5] : memref<16x512xf32, #tpu.memory_space<vmem>>, vector<1x512xf32>
    %15 = vector.broadcast %14 : vector<1x512xf32> to vector<8x512xf32>
    %16 = arith.mulf %13, %15 : vector<8x512xf32>
    %c506_i32 = arith.constant 506 : i32
    %17 = tpu.dynamic_rotate %0 by %c506_i32 dim 1 : vector<8x512xf32>, i32 -> vector<8x512xf32>
    %c4 = arith.constant 4 : index
    %c0_6 = arith.constant 0 : index
    %18 = vector.load %arg2[%c4, %c0_6] : memref<16x512xf32, #tpu.memory_space<vmem>>, vector<1x512xf32>
    %19 = vector.broadcast %18 : vector<1x512xf32> to vector<8x512xf32>
    %20 = arith.mulf %17, %19 : vector<8x512xf32>
    %c422_i32 = arith.constant 422 : i32
    %21 = tpu.dynamic_rotate %0 by %c422_i32 dim 1 : vector<8x512xf32>, i32 -> vector<8x512xf32>
    %c5 = arith.constant 5 : index
    %c0_7 = arith.constant 0 : index
    %22 = vector.load %arg2[%c5, %c0_7] : memref<16x512xf32, #tpu.memory_space<vmem>>, vector<1x512xf32>
    %23 = vector.broadcast %22 : vector<1x512xf32> to vector<8x512xf32>
    %24 = arith.mulf %21, %23 : vector<8x512xf32>
    %c416_i32 = arith.constant 416 : i32
    %25 = tpu.dynamic_rotate %0 by %c416_i32 dim 1 : vector<8x512xf32>, i32 -> vector<8x512xf32>
    %c6 = arith.constant 6 : index
    %c0_8 = arith.constant 0 : index
    %26 = vector.load %arg2[%c6, %c0_8] : memref<16x512xf32, #tpu.memory_space<vmem>>, vector<1x512xf32>
    %27 = vector.broadcast %26 : vector<1x512xf32> to vector<8x512xf32>
    %28 = arith.mulf %25, %27 : vector<8x512xf32>
    %c410_i32 = arith.constant 410 : i32
    %29 = tpu.dynamic_rotate %0 by %c410_i32 dim 1 : vector<8x512xf32>, i32 -> vector<8x512xf32>
    %c7 = arith.constant 7 : index
    %c0_9 = arith.constant 0 : index
    %30 = vector.load %arg2[%c7, %c0_9] : memref<16x512xf32, #tpu.memory_space<vmem>>, vector<1x512xf32>
    %31 = vector.broadcast %30 : vector<1x512xf32> to vector<8x512xf32>
    %32 = arith.mulf %29, %31 : vector<8x512xf32>
    %c204_i32 = arith.constant 204 : i32
    %33 = tpu.dynamic_rotate %0 by %c204_i32 dim 1 : vector<8x512xf32>, i32 -> vector<8x512xf32>
    %c8 = arith.constant 8 : index
    %c0_10 = arith.constant 0 : index
    %34 = vector.load %arg2[%c8, %c0_10] : memref<16x512xf32, #tpu.memory_space<vmem>>, vector<1x512xf32>
    %35 = vector.broadcast %34 : vector<1x512xf32> to vector<8x512xf32>
    %36 = arith.mulf %33, %35 : vector<8x512xf32>
    %c192_i32 = arith.constant 192 : i32
    %37 = tpu.dynamic_rotate %0 by %c192_i32 dim 1 : vector<8x512xf32>, i32 -> vector<8x512xf32>
    %c9 = arith.constant 9 : index
    %c0_11 = arith.constant 0 : index
    %38 = vector.load %arg2[%c9, %c0_11] : memref<16x512xf32, #tpu.memory_space<vmem>>, vector<1x512xf32>
    %39 = vector.broadcast %38 : vector<1x512xf32> to vector<8x512xf32>
    %40 = arith.mulf %37, %39 : vector<8x512xf32>
    %c180_i32 = arith.constant 180 : i32
    %41 = tpu.dynamic_rotate %0 by %c180_i32 dim 1 : vector<8x512xf32>, i32 -> vector<8x512xf32>
    %c10 = arith.constant 10 : index
    %c0_12 = arith.constant 0 : index
    %42 = vector.load %arg2[%c10, %c0_12] : memref<16x512xf32, #tpu.memory_space<vmem>>, vector<1x512xf32>
    %43 = vector.broadcast %42 : vector<1x512xf32> to vector<8x512xf32>
    %44 = arith.mulf %41, %43 : vector<8x512xf32>
    %c12_i32 = arith.constant 12 : i32
    %45 = tpu.dynamic_rotate %0 by %c12_i32 dim 1 : vector<8x512xf32>, i32 -> vector<8x512xf32>
    %c11 = arith.constant 11 : index
    %c0_13 = arith.constant 0 : index
    %46 = vector.load %arg2[%c11, %c0_13] : memref<16x512xf32, #tpu.memory_space<vmem>>, vector<1x512xf32>
    %47 = vector.broadcast %46 : vector<1x512xf32> to vector<8x512xf32>
    %48 = arith.mulf %45, %47 : vector<8x512xf32>
    %c500_i32 = arith.constant 500 : i32
    %49 = tpu.dynamic_rotate %0 by %c500_i32 dim 1 : vector<8x512xf32>, i32 -> vector<8x512xf32>
    %c12 = arith.constant 12 : index
    %c0_14 = arith.constant 0 : index
    %50 = vector.load %arg2[%c12, %c0_14] : memref<16x512xf32, #tpu.memory_space<vmem>>, vector<1x512xf32>
    %51 = vector.broadcast %50 : vector<1x512xf32> to vector<8x512xf32>
    %52 = arith.mulf %49, %51 : vector<8x512xf32>
    %c332_i32 = arith.constant 332 : i32
    %53 = tpu.dynamic_rotate %0 by %c332_i32 dim 1 : vector<8x512xf32>, i32 -> vector<8x512xf32>
    %c13 = arith.constant 13 : index
    %c0_15 = arith.constant 0 : index
    %54 = vector.load %arg2[%c13, %c0_15] : memref<16x512xf32, #tpu.memory_space<vmem>>, vector<1x512xf32>
    %55 = vector.broadcast %54 : vector<1x512xf32> to vector<8x512xf32>
    %56 = arith.mulf %53, %55 : vector<8x512xf32>
    %c320_i32 = arith.constant 320 : i32
    %57 = tpu.dynamic_rotate %0 by %c320_i32 dim 1 : vector<8x512xf32>, i32 -> vector<8x512xf32>
    %c14 = arith.constant 14 : index
    %c0_16 = arith.constant 0 : index
    %58 = vector.load %arg2[%c14, %c0_16] : memref<16x512xf32, #tpu.memory_space<vmem>>, vector<1x512xf32>
    %59 = vector.broadcast %58 : vector<1x512xf32> to vector<8x512xf32>
    %60 = arith.mulf %57, %59 : vector<8x512xf32>
    %c308_i32 = arith.constant 308 : i32
    %61 = tpu.dynamic_rotate %0 by %c308_i32 dim 1 : vector<8x512xf32>, i32 -> vector<8x512xf32>
    %c15 = arith.constant 15 : index
    %c0_17 = arith.constant 0 : index
    %62 = vector.load %arg2[%c15, %c0_17] : memref<16x512xf32, #tpu.memory_space<vmem>>, vector<1x512xf32>
    %63 = vector.broadcast %62 : vector<1x512xf32> to vector<8x512xf32>
    %64 = arith.mulf %61, %63 : vector<8x512xf32>
    %c0_18 = arith.constant 0 : index
    %c0_19 = arith.constant 0 : index
    %65 = vector.load %arg3[%c0_18, %c0_19] : memref<2x512xf32, #tpu.memory_space<vmem>>, vector<1x512xf32>
    %66 = vector.broadcast %65 : vector<1x512xf32> to vector<8x512xf32>
    %67 = arith.mulf %0, %66 : vector<8x512xf32>
    %cst = arith.constant dense<0.000000e+00> : vector<8xf32>
    %68 = vector.multi_reduction <add>, %67, %cst [1] : vector<8x512xf32> to vector<8xf32>
    %69 = vector.shape_cast %68 : vector<8xf32> to vector<8x1xf32>
    %cst_20 = arith.constant 3.906250e-03 : f32
    %70 = vector.broadcast %cst_20 : f32 to vector<8x1xf32>
    %71 = arith.mulf %69, %70 : vector<8x1xf32>
    %72 = vector.broadcast %71 : vector<8x1xf32> to vector<8x512xf32>
    %73 = vector.broadcast %65 : vector<1x512xf32> to vector<8x512xf32>
    %74 = arith.mulf %72, %73 : vector<8x512xf32>
    %c1_21 = arith.constant 1 : index
    %c0_22 = arith.constant 0 : index
    %75 = vector.load %arg3[%c1_21, %c0_22] : memref<2x512xf32, #tpu.memory_space<vmem>>, vector<1x512xf32>
    %76 = vector.broadcast %75 : vector<1x512xf32> to vector<8x512xf32>
    %77 = arith.mulf %0, %76 : vector<8x512xf32>
    %cst_23 = arith.constant dense<0.000000e+00> : vector<8xf32>
    %78 = vector.multi_reduction <add>, %77, %cst_23 [1] : vector<8x512xf32> to vector<8xf32>
    %79 = vector.shape_cast %78 : vector<8xf32> to vector<8x1xf32>
    %cst_24 = arith.constant 3.906250e-03 : f32
    %80 = vector.broadcast %cst_24 : f32 to vector<8x1xf32>
    %81 = arith.mulf %79, %80 : vector<8x1xf32>
    %82 = vector.broadcast %81 : vector<8x1xf32> to vector<8x512xf32>
    %83 = vector.broadcast %75 : vector<1x512xf32> to vector<8x512xf32>
    %84 = arith.mulf %82, %83 : vector<8x512xf32>
    %85 = arith.addf %74, %84 : vector<8x512xf32>
    %86 = tpu.concatenate %0, %4, %8, %12, %16, %20, %24, %28, %32, %36, %40, %44, %48, %52, %56, %60 in 0 : vector<8x512xf32>, vector<8x512xf32>, vector<8x512xf32>, vector<8x512xf32>, vector<8x512xf32>, vector<8x512xf32>, vector<8x512xf32>, vector<8x512xf32>, vector<8x512xf32>, vector<8x512xf32>, vector<8x512xf32>, vector<8x512xf32>, vector<8x512xf32>, vector<8x512xf32>, vector<8x512xf32>, vector<8x512xf32> -> vector<128x512xf32>
    %87 = tpu.concatenate %64, %85 in 0 : vector<8x512xf32>, vector<8x512xf32> -> vector<16x512xf32>
    %88 = tpu.concatenate %86, %87 in 0 : vector<128x512xf32>, vector<16x512xf32> -> vector<144x512xf32>
    %c0_25 = arith.constant 0 : index
    %c0_26 = arith.constant 0 : index
    %89 = vector.load %arg4[%c0_25, %c0_26] : memref<40x144xf32, #tpu.memory_space<vmem>>, vector<40x144xf32>
    %cst_27 = arith.constant dense<0.000000e+00> : vector<40x512xf32>
    %90 = tpu.matmul %89, %88, %cst_27 {dimension_numbers = #tpu.dot_dimension_numbers<[1], [0], [0], [1], [0, 0, 1, 1], [], []>} : vector<40x144xf32>, vector<144x512xf32>, vector<40x512xf32> -> vector<40x512xf32>
    %c0_28 = arith.constant 0 : index
    %c0_29 = arith.constant 0 : index
    %91 = vector.load %arg5[%c0_28, %c0_29] : memref<40x1xf32, #tpu.memory_space<vmem>>, vector<40x1xf32>
    %92 = vector.broadcast %91 : vector<40x1xf32> to vector<40x512xf32>
    %93 = arith.addf %90, %92 : vector<40x512xf32>
    %cst_30 = arith.constant 0.000000e+00 : f32
    %94 = vector.broadcast %cst_30 : f32 to vector<40x512xf32>
    %95 = arith.maximumf %93, %94 : vector<40x512xf32>
    %c0_31 = arith.constant 0 : index
    %c0_32 = arith.constant 0 : index
    %96 = vector.load %arg6[%c0_31, %c0_32] : memref<8x40xf32, #tpu.memory_space<vmem>>, vector<8x40xf32>
    %cst_33 = arith.constant dense<0.000000e+00> : vector<8x512xf32>
    %97 = tpu.matmul %96, %95, %cst_33 {dimension_numbers = #tpu.dot_dimension_numbers<[1], [0], [0], [1], [0, 0, 1, 1], [], []>} : vector<8x40xf32>, vector<40x512xf32>, vector<8x512xf32> -> vector<8x512xf32>
    %c0_34 = arith.constant 0 : index
    %c0_35 = arith.constant 0 : index
    %98 = vector.load %arg7[%c0_34, %c0_35] : memref<8x1xf32, #tpu.memory_space<vmem>>, vector<8x1xf32>
    %99 = vector.broadcast %98 : vector<8x1xf32> to vector<8x512xf32>
    %100 = arith.addf %97, %99 : vector<8x512xf32>
    %cst_36 = arith.constant 0.000000e+00 : f32
    %101 = vector.broadcast %cst_36 : f32 to vector<8x512xf32>
    %102 = arith.maximumf %100, %101 : vector<8x512xf32>
    %c0_37 = arith.constant 0 : index
    %c0_38 = arith.constant 0 : index
    %103 = vector.load %arg8[%c0_37, %c0_38] : memref<8x512xf32, #tpu.memory_space<vmem>>, vector<8x512xf32>
    tpu.vector_store %arg8[%c0_37, %c0_38], %102 {strides = array<i32>} : memref<8x512xf32, #tpu.memory_space<vmem>>, vector<8x512xf32>,
    return
  }
  func.func @transform_0(%arg0: i32) -> (i32, i32) {
    %c0_i32 = arith.constant 0 : i32
    %c0_i32_0 = arith.constant 0 : i32
    %c0_i32_1 = arith.constant 0 : i32
    return %c0_i32, %c0_i32_0 : i32, i32
  }
  func.func @transform_1(%arg0: i32) -> (i32, i32) {
    %c0_i32 = arith.constant 0 : i32
    %c0_i32_0 = arith.constant 0 : i32
    %c0_i32_1 = arith.constant 0 : i32
    return %c0_i32, %c0_i32_0 : i32, i32
  }
  func.func @transform_2(%arg0: i32) -> (i32, i32) {
    %c0_i32 = arith.constant 0 : i32
    %c0_i32_0 = arith.constant 0 : i32
    %c0_i32_1 = arith.constant 0 : i32
    return %c0_i32, %c0_i32_0 : i32, i32
  }
  func.func @transform_3(%arg0: i32) -> (i32, i32) {
    %c0_i32 = arith.constant 0 : i32
    %c0_i32_0 = arith.constant 0 : i32
    %c0_i32_1 = arith.constant 0 : i32
    return %c0_i32, %c0_i32_0 : i32, i32
  }
  func.func @transform_4(%arg0: i32) -> (i32, i32) {
    %c0_i32 = arith.constant 0 : i32
    %c0_i32_0 = arith.constant 0 : i32
    %c0_i32_1 = arith.constant 0 : i32
    return %c0_i32, %c0_i32_0 : i32, i32
  }
  func.func @transform_5(%arg0: i32) -> (i32, i32) {
    %c0_i32 = arith.constant 0 : i32
    %c0_i32_0 = arith.constant 0 : i32
    %c0_i32_1 = arith.constant 0 : i32
    return %c0_i32, %c0_i32_0 : i32, i32
  }
  func.func @transform_6(%arg0: i32) -> (i32, i32) {
    %c0_i32 = arith.constant 0 : i32
    %c0_i32_0 = arith.constant 0 : i32
    %c0_i32_1 = arith.constant 0 : i32
    return %c0_i32, %c0_i32_0 : i32, i32
  }
  func.func @transform_7(%arg0: i32) -> (i32, i32) {
    %c0_i32 = arith.constant 0 : i32
    %c0_i32_0 = arith.constant 0 : i32
    %c0_i32_1 = arith.constant 0 : i32
    return %c0_i32, %c0_i32_0 : i32, i32
  }
}

</mosaic_0001>

<llo_original>
// kernel: aspp_forward.1
$region0: #{aspp_forward.1}
  #allocation0 [shape = 'u32[]', space=smem, size = 0x4, offset = 0x4, fixed_abs, tag = 'smem constant byte address 0x4 - core index']
  #allocation1 [shape = 'u32[144,128]{1,0:T(1,128)}', space=vmem, size = 0x12000, scoped, tag = 'internal scratch']
  %s0 = inlined_call_operand.vmem [shape: f32[8,512], index: 0, kind: input, shape index: {}]
  %s1 = inlined_call_operand.vmem [shape: f32[16,512], index: 1, kind: input, shape index: {}]
  %s2 = inlined_call_operand.vmem [shape: f32[2,512], index: 2, kind: input, shape index: {}]
  %s3 = inlined_call_operand.vmem [shape: f32[40,144], index: 3, kind: input, shape index: {}]
  %s4 = inlined_call_operand.vmem [shape: f32[40,1], index: 4, kind: input, shape index: {}]
  %s5 = inlined_call_operand.vmem [shape: f32[8,40], index: 5, kind: input, shape index: {}]
  %s6 = inlined_call_operand.vmem [shape: f32[8,1], index: 6, kind: input, shape index: {}]
  %s7 = inlined_call_operand.vmem [shape: f32[8,512], index: 7, kind: output, shape index: {}]
  %s8 = sld [smem:[#allocation0]]
  $region38: #{aspp_forward.1} parent=0
    _
  %s10 = ssub.s32 1, %s8
  %s11 = scalar_select 0, %s10, %s8
  // Predicated region
  $region2: #{aspp_forward.1} parent=0 // pred_check
    _
  $region3: #{aspp_forward.1} parent=0 // pred_check_branch
    %13 = sbr.rel (0) target = $region5
  $region4: #{aspp_forward.1} parent=0 // pred_region
    _
  $region5: #{aspp_forward.1} parent=0 // pred_fallthru
    _
  // Predicated region
  $region6: #{aspp_forward.1} parent=0 // pred_check
    _
  $region7: #{aspp_forward.1} parent=0 // pred_check_branch
    %15 = sbr.rel (0) target = $region9
  $region8: #{aspp_forward.1} parent=0 // pred_region
    _
  $region9: #{aspp_forward.1} parent=0 // pred_fallthru
    _
  // Predicated region
  $region10: #{aspp_forward.1} parent=0 // pred_check
    _
  $region11: #{aspp_forward.1} parent=0 // pred_check_branch
    %17 = sbr.rel (0) target = $region13
  $region12: #{aspp_forward.1} parent=0 // pred_region
    _
  $region13: #{aspp_forward.1} parent=0 // pred_fallthru
    _
  // Predicated region
  $region14: #{aspp_forward.1} parent=0 // pred_check
    _
  $region15: #{aspp_forward.1} parent=0 // pred_check_branch
    %19 = sbr.rel (0) target = $region17
  $region16: #{aspp_forward.1} parent=0 // pred_region
    _
  $region17: #{aspp_forward.1} parent=0 // pred_fallthru
    _
  // Predicated region
  $region18: #{aspp_forward.1} parent=0 // pred_check
    _
  $region19: #{aspp_forward.1} parent=0 // pred_check_branch
    %21 = sbr.rel (0) target = $region21
  $region20: #{aspp_forward.1} parent=0 // pred_region
    _
  $region21: #{aspp_forward.1} parent=0 // pred_fallthru
    _
  // Predicated region
  $region22: #{aspp_forward.1} parent=0 // pred_check
    _
  $region23: #{aspp_forward.1} parent=0 // pred_check_branch
    %23 = sbr.rel (0) target = $region25
  $region24: #{aspp_forward.1} parent=0 // pred_region
    _
  $region25: #{aspp_forward.1} parent=0 // pred_fallthru
    _
  // Predicated region
  $region26: #{aspp_forward.1} parent=0 // pred_check
    _
  $region27: #{aspp_forward.1} parent=0 // pred_check_branch
    %25 = sbr.rel (0) target = $region29
  $region28: #{aspp_forward.1} parent=0 // pred_region
    _
  $region29: #{aspp_forward.1} parent=0 // pred_fallthru
    _
  %v26 = vld [vmem:[%s0] sm:$0xff]
  %v27 = vld [vmem:[%s0 + $0x8] sm:$0xff]
  %v28 = vld [vmem:[%s0 + $0x10] sm:$0xff]
  %v29 = vld [vmem:[%s0 + $0x18] sm:$0xff]
  %30 = vrot.lane.b32.xlu0 %v26, 102
  %v31 = vpop.permute.xlu0 %30
  %32 = vrot.lane.b32.xlu0 %v27, 102
  %v33 = vpop.permute.xlu0 %32
  %34 = vrot.lane.b32.xlu0 %v28, 102
  %v35 = vpop.permute.xlu0 %34
  %36 = vrot.lane.b32.xlu0 %v29, 102
  %v37 = vpop.permute.xlu0 %36
  %v38 = vlaneseq
  %v39 = vand.u32 %v38, 127
  %vm40 = vcmp.lt.s32.totalorder %v39, 102
  %v41 = vsel %vm40, %v35, %v37
  %v42 = vsel %vm40, %v33, %v35
  %v43 = vsel %vm40, %v31, %v33
  %v44 = vsel %vm40, %v37, %v31
  %v45 = vld [vmem:[%s1] ss:$8 sm:$0xf]
  %v47 = vlaneseq
  %v48 = vshrl.u32 %v47, 7
  %v49 = vsub.s32 0, %v48
  %v50 = vrot.slane %v45, %v49
  %v51 = vlaneseq
  %v52 = vshrl.u32 %v51, 7
  %v53 = vsub.s32 1, %v52
  %v54 = vrot.slane %v45, %v53
  %v55 = vlaneseq
  %v56 = vshrl.u32 %v55, 7
  %v57 = vsub.s32 2, %v56
  %v58 = vrot.slane %v45, %v57
  %v59 = vlaneseq
  %v60 = vshrl.u32 %v59, 7
  %v61 = vsub.s32 3, %v60
  %v62 = vrot.slane %v45, %v61
  %v67 = vmul.f32 %v44, %v50
  %v68 = vmul.f32 %v43, %v54
  %v69 = vmul.f32 %v42, %v58
  %v70 = vmul.f32 %v41, %v62
  %71 = vrot.lane.b32.xlu0 %v26, 96
  %v72 = vpop.permute.xlu0 %71
  %73 = vrot.lane.b32.xlu0 %v27, 96
  %v74 = vpop.permute.xlu0 %73
  %75 = vrot.lane.b32.xlu0 %v28, 96
  %v76 = vpop.permute.xlu0 %75
  %77 = vrot.lane.b32.xlu0 %v29, 96
  %v78 = vpop.permute.xlu0 %77
  %vm79 = vcmp.lt.s32.totalorder %v39, 96
  %v80 = vsel %vm79, %v76, %v78
  %v81 = vsel %vm79, %v74, %v76
  %v82 = vsel %vm79, %v72, %v74
  %v83 = vsel %vm79, %v78, %v72
  %s84 = scalar_lea.vmem %s1, 1
  %v85 = vld [vmem:[%s84] ss:$8 sm:$0xf]
  %v87 = vlaneseq
  %v88 = vshrl.u32 %v87, 7
  %v89 = vsub.s32 0, %v88
  %v90 = vrot.slane %v85, %v89
  %v91 = vlaneseq
  %v92 = vshrl.u32 %v91, 7
  %v93 = vsub.s32 1, %v92
  %v94 = vrot.slane %v85, %v93
  %v95 = vlaneseq
  %v96 = vshrl.u32 %v95, 7
  %v97 = vsub.s32 2, %v96
  %v98 = vrot.slane %v85, %v97
  %v99 = vlaneseq
  %v100 = vshrl.u32 %v99, 7
  %v101 = vsub.s32 3, %v100
  %v102 = vrot.slane %v85, %v101
  %v107 = vmul.f32 %v83, %v90
  %v108 = vmul.f32 %v82, %v94
  %v109 = vmul.f32 %v81, %v98
  %v110 = vmul.f32 %v80, %v102
  %111 = vrot.lane.b32.xlu0 %v26, 90
  %v112 = vpop.permute.xlu0 %111
  %113 = vrot.lane.b32.xlu0 %v27, 90
  %v114 = vpop.permute.xlu0 %113
  %115 = vrot.lane.b32.xlu0 %v28, 90
  %v116 = vpop.permute.xlu0 %115
  %117 = vrot.lane.b32.xlu0 %v29, 90
  %v118 = vpop.permute.xlu0 %117
  %vm119 = vcmp.lt.s32.totalorder %v39, 90
  %v120 = vsel %vm119, %v116, %v118
  %v121 = vsel %vm119, %v114, %v116
  %v122 = vsel %vm119, %v112, %v114
  %v123 = vsel %vm119, %v118, %v112
  %s124 = scalar_lea.vmem %s1, 2
  %v125 = vld [vmem:[%s124] ss:$8 sm:$0xf]
  %v127 = vlaneseq
  %v128 = vshrl.u32 %v127, 7
  %v129 = vsub.s32 0, %v128
  %v130 = vrot.slane %v125, %v129
  %v131 = vlaneseq
  %v132 = vshrl.u32 %v131, 7
  %v133 = vsub.s32 1, %v132
  %v134 = vrot.slane %v125, %v133
  %v135 = vlaneseq
  %v136 = vshrl.u32 %v135, 7
  %v137 = vsub.s32 2, %v136
  %v138 = vrot.slane %v125, %v137
  %v139 = vlaneseq
  %v140 = vshrl.u32 %v139, 7
  %v141 = vsub.s32 3, %v140
  %v142 = vrot.slane %v125, %v141
  %v147 = vmul.f32 %v123, %v130
  %v148 = vmul.f32 %v122, %v134
  %v149 = vmul.f32 %v121, %v138
  %v150 = vmul.f32 %v120, %v142
  %151 = vrot.lane.b32.xlu0 %v26, 6
  %v152 = vpop.permute.xlu0 %151
  %153 = vrot.lane.b32.xlu0 %v27, 6
  %v154 = vpop.permute.xlu0 %153
  %155 = vrot.lane.b32.xlu0 %v28, 6
  %v156 = vpop.permute.xlu0 %155
  %157 = vrot.lane.b32.xlu0 %v29, 6
  %v158 = vpop.permute.xlu0 %157
  %vm159 = vcmp.lt.s32.totalorder %v39, 6
  %v160 = vsel %vm159, %v156, %v158
  %v161 = vsel %vm159, %v154, %v156
  %v162 = vsel %vm159, %v152, %v154
  %v163 = vsel %vm159, %v158, %v152
  %s164 = scalar_lea.vmem %s1, 3
  %v165 = vld [vmem:[%s164] ss:$8 sm:$0xf]
  %v167 = vlaneseq
  %v168 = vshrl.u32 %v167, 7
  %v169 = vsub.s32 0, %v168
  %v170 = vrot.slane %v165, %v169
  %v171 = vlaneseq
  %v172 = vshrl.u32 %v171, 7
  %v173 = vsub.s32 1, %v172
  %v174 = vrot.slane %v165, %v173
  %v175 = vlaneseq
  %v176 = vshrl.u32 %v175, 7
  %v177 = vsub.s32 2, %v176
  %v178 = vrot.slane %v165, %v177
  %v179 = vlaneseq
  %v180 = vshrl.u32 %v179, 7
  %v181 = vsub.s32 3, %v180
  %v182 = vrot.slane %v165, %v181
  %v187 = vmul.f32 %v163, %v170
  %v188 = vmul.f32 %v162, %v174
  %v189 = vmul.f32 %v161, %v178
  %v190 = vmul.f32 %v160, %v182
  %191 = vrot.lane.b32.xlu0 %v26, 122
  %v192 = vpop.permute.xlu0 %191
  %193 = vrot.lane.b32.xlu0 %v27, 122
  %v194 = vpop.permute.xlu0 %193
  %195 = vrot.lane.b32.xlu0 %v28, 122
  %v196 = vpop.permute.xlu0 %195
  %197 = vrot.lane.b32.xlu0 %v29, 122
  %v198 = vpop.permute.xlu0 %197
  %vm199 = vcmp.lt.s32.totalorder %v39, 122
  %v200 = vsel %vm199, %v196, %v198
  %v201 = vsel %vm199, %v194, %v196
  %v202 = vsel %vm199, %v192, %v194
  %v203 = vsel %vm199, %v198, %v192
  %s204 = scalar_lea.vmem %s1, 4
  %v205 = vld [vmem:[%s204] ss:$8 sm:$0xf]
  %v207 = vlaneseq
  %v208 = vshrl.u32 %v207, 7
  %v209 = vsub.s32 0, %v208
  %v210 = vrot.slane %v205, %v209
  %v211 = vlaneseq
  %v212 = vshrl.u32 %v211, 7
  %v213 = vsub.s32 1, %v212
  %v214 = vrot.slane %v205, %v213
  %v215 = vlaneseq
  %v216 = vshrl.u32 %v215, 7
  %v217 = vsub.s32 2, %v216
  %v218 = vrot.slane %v205, %v217
  %v219 = vlaneseq
  %v220 = vshrl.u32 %v219, 7
  %v221 = vsub.s32 3, %v220
  %v222 = vrot.slane %v205, %v221
  %v227 = vmul.f32 %v202, %v210
  %v228 = vmul.f32 %v201, %v214
  %v229 = vmul.f32 %v200, %v218
  %v230 = vmul.f32 %v203, %v222
  %231 = vrot.lane.b32.xlu0 %v26, 38
  %v232 = vpop.permute.xlu0 %231
  %233 = vrot.lane.b32.xlu0 %v27, 38
  %v234 = vpop.permute.xlu0 %233
  %235 = vrot.lane.b32.xlu0 %v28, 38
  %v236 = vpop.permute.xlu0 %235
  %237 = vrot.lane.b32.xlu0 %v29, 38
  %v238 = vpop.permute.xlu0 %237
  %vm239 = vcmp.lt.s32.totalorder %v39, 38
  %v240 = vsel %vm239, %v236, %v238
  %v241 = vsel %vm239, %v234, %v236
  %v242 = vsel %vm239, %v232, %v234
  %v243 = vsel %vm239, %v238, %v232
  %s244 = scalar_lea.vmem %s1, 5
  %v245 = vld [vmem:[%s244] ss:$8 sm:$0xf]
  %v247 = vlaneseq
  %v248 = vshrl.u32 %v247, 7
  %v249 = vsub.s32 0, %v248
  %v250 = vrot.slane %v245, %v249
  %v251 = vlaneseq
  %v252 = vshrl.u32 %v251, 7
  %v253 = vsub.s32 1, %v252
  %v254 = vrot.slane %v245, %v253
  %v255 = vlaneseq
  %v256 = vshrl.u32 %v255, 7
  %v257 = vsub.s32 2, %v256
  %v258 = vrot.slane %v245, %v257
  %v259 = vlaneseq
  %v260 = vshrl.u32 %v259, 7
  %v261 = vsub.s32 3, %v260
  %v262 = vrot.slane %v245, %v261
  %v267 = vmul.f32 %v242, %v250
  %v268 = vmul.f32 %v241, %v254
  %v269 = vmul.f32 %v240, %v258
  %v270 = vmul.f32 %v243, %v262
  %271 = vrot.lane.b32.xlu0 %v26, 32
  %v272 = vpop.permute.xlu0 %271
  %273 = vrot.lane.b32.xlu0 %v27, 32
  %v274 = vpop.permute.xlu0 %273
  %275 = vrot.lane.b32.xlu0 %v28, 32
  %v276 = vpop.permute.xlu0 %275
  %277 = vrot.lane.b32.xlu0 %v29, 32
  %v278 = vpop.permute.xlu0 %277
  %vm279 = vcmp.lt.s32.totalorder %v39, 32
  %v280 = vsel %vm279, %v276, %v278
  %v281 = vsel %vm279, %v274, %v276
  %v282 = vsel %vm279, %v272, %v274
  %v283 = vsel %vm279, %v278, %v272
  %s284 = scalar_lea.vmem %s1, 6
  %v285 = vld [vmem:[%s284] ss:$8 sm:$0xf]
  %v287 = vlaneseq
  %v288 = vshrl.u32 %v287, 7
  %v289 = vsub.s32 0, %v288
  %v290 = vrot.slane %v285, %v289
  %v291 = vlaneseq
  %v292 = vshrl.u32 %v291, 7
  %v293 = vsub.s32 1, %v292
  %v294 = vrot.slane %v285, %v293
  %v295 = vlaneseq
  %v296 = vshrl.u32 %v295, 7
  %v297 = vsub.s32 2, %v296
  %v298 = vrot.slane %v285, %v297
  %v299 = vlaneseq
  %v300 = vshrl.u32 %v299, 7
  %v301 = vsub.s32 3, %v300
  %v302 = vrot.slane %v285, %v301
  %v307 = vmul.f32 %v282, %v290
  %v308 = vmul.f32 %v281, %v294
  %v309 = vmul.f32 %v280, %v298
  %v310 = vmul.f32 %v283, %v302
  %311 = vrot.lane.b32.xlu0 %v26, 26
  %v312 = vpop.permute.xlu0 %311
  %313 = vrot.lane.b32.xlu0 %v27, 26
  %v314 = vpop.permute.xlu0 %313
  %315 = vrot.lane.b32.xlu0 %v28, 26
  %v316 = vpop.permute.xlu0 %315
  %317 = vrot.lane.b32.xlu0 %v29, 26
  %v318 = vpop.permute.xlu0 %317
  %vm319 = vcmp.lt.s32.totalorder %v39, 26
  %v320 = vsel %vm319, %v316, %v318
  %v321 = vsel %vm319, %v314, %v316
  %v322 = vsel %vm319, %v312, %v314
  %v323 = vsel %vm319, %v318, %v312
  %s324 = scalar_lea.vmem %s1, 7
  %v325 = vld [vmem:[%s324] ss:$8 sm:$0xf]
  %v327 = vlaneseq
  %v328 = vshrl.u32 %v327, 7
  %v329 = vsub.s32 0, %v328
  %v330 = vrot.slane %v325, %v329
  %v331 = vlaneseq
  %v332 = vshrl.u32 %v331, 7
  %v333 = vsub.s32 1, %v332
  %v334 = vrot.slane %v325, %v333
  %v335 = vlaneseq
  %v336 = vshrl.u32 %v335, 7
  %v337 = vsub.s32 2, %v336
  %v338 = vrot.slane %v325, %v337
  %v339 = vlaneseq
  %v340 = vshrl.u32 %v339, 7
  %v341 = vsub.s32 3, %v340
  %v342 = vrot.slane %v325, %v341
  %v347 = vmul.f32 %v322, %v330
  %v348 = vmul.f32 %v321, %v334
  %v349 = vmul.f32 %v320, %v338
  %v350 = vmul.f32 %v323, %v342
  %351 = vrot.lane.b32.xlu0 %v26, 76
  %v352 = vpop.permute.xlu0 %351
  %353 = vrot.lane.b32.xlu0 %v27, 76
  %v354 = vpop.permute.xlu0 %353
  %355 = vrot.lane.b32.xlu0 %v28, 76
  %v356 = vpop.permute.xlu0 %355
  %357 = vrot.lane.b32.xlu0 %v29, 76
  %v358 = vpop.permute.xlu0 %357
  %vm359 = vcmp.lt.s32.totalorder %v39, 76
  %v360 = vsel %vm359, %v356, %v358
  %v361 = vsel %vm359, %v354, %v356
  %v362 = vsel %vm359, %v352, %v354
  %v363 = vsel %vm359, %v358, %v352
  %s364 = scalar_lea.vmem %s1, 32
  %v365 = vld [vmem:[%s364] ss:$8 sm:$0xf]
  %v367 = vlaneseq
  %v368 = vshrl.u32 %v367, 7
  %v369 = vsub.s32 0, %v368
  %v370 = vrot.slane %v365, %v369
  %v371 = vlaneseq
  %v372 = vshrl.u32 %v371, 7
  %v373 = vsub.s32 1, %v372
  %v374 = vrot.slane %v365, %v373
  %v375 = vlaneseq
  %v376 = vshrl.u32 %v375, 7
  %v377 = vsub.s32 2, %v376
  %v378 = vrot.slane %v365, %v377
  %v379 = vlaneseq
  %v380 = vshrl.u32 %v379, 7
  %v381 = vsub.s32 3, %v380
  %v382 = vrot.slane %v365, %v381
  %v387 = vmul.f32 %v360, %v370
  %v388 = vmul.f32 %v363, %v374
  %v389 = vmul.f32 %v362, %v378
  %v390 = vmul.f32 %v361, %v382
  %391 = vrot.lane.b32.xlu0 %v26, 64
  %v392 = vpop.permute.xlu0 %391
  %393 = vrot.lane.b32.xlu0 %v27, 64
  %v394 = vpop.permute.xlu0 %393
  %395 = vrot.lane.b32.xlu0 %v28, 64
  %v396 = vpop.permute.xlu0 %395
  %397 = vrot.lane.b32.xlu0 %v29, 64
  %v398 = vpop.permute.xlu0 %397
  %vm399 = vcmp.lt.s32.totalorder %v39, 64
  %v400 = vsel %vm399, %v396, %v398
  %v401 = vsel %vm399, %v394, %v396
  %v402 = vsel %vm399, %v392, %v394
  %v403 = vsel %vm399, %v398, %v392
  %s404 = scalar_lea.vmem %s1, 33
  %v405 = vld [vmem:[%s404] ss:$8 sm:$0xf]
  %v407 = vlaneseq
  %v408 = vshrl.u32 %v407, 7
  %v409 = vsub.s32 0, %v408
  %v410 = vrot.slane %v405, %v409
  %v411 = vlaneseq
  %v412 = vshrl.u32 %v411, 7
  %v413 = vsub.s32 1, %v412
  %v414 = vrot.slane %v405, %v413
  %v415 = vlaneseq
  %v416 = vshrl.u32 %v415, 7
  %v417 = vsub.s32 2, %v416
  %v418 = vrot.slane %v405, %v417
  %v419 = vlaneseq
  %v420 = vshrl.u32 %v419, 7
  %v421 = vsub.s32 3, %v420
  %v422 = vrot.slane %v405, %v421
  %v427 = vmul.f32 %v400, %v410
  %v428 = vmul.f32 %v403, %v414
  %v429 = vmul.f32 %v402, %v418
  %v430 = vmul.f32 %v401, %v422
  %431 = vrot.lane.b32.xlu0 %v26, 52
  %v432 = vpop.permute.xlu0 %431
  %433 = vrot.lane.b32.xlu0 %v27, 52
  %v434 = vpop.permute.xlu0 %433
  %435 = vrot.lane.b32.xlu0 %v28, 52
  %v436 = vpop.permute.xlu0 %435
  %437 = vrot.lane.b32.xlu0 %v29, 52
  %v438 = vpop.permute.xlu0 %437
  %vm439 = vcmp.lt.s32.totalorder %v39, 52
  %v440 = vsel %vm439, %v436, %v438
  %v441 = vsel %vm439, %v434, %v436
  %v442 = vsel %vm439, %v432, %v434
  %v443 = vsel %vm439, %v438, %v432
  %s444 = scalar_lea.vmem %s1, 34
  %v445 = vld [vmem:[%s444] ss:$8 sm:$0xf]
  %v447 = vlaneseq
  %v448 = vshrl.u32 %v447, 7
  %v449 = vsub.s32 0, %v448
  %v450 = vrot.slane %v445, %v449
  %v451 = vlaneseq
  %v452 = vshrl.u32 %v451, 7
  %v453 = vsub.s32 1, %v452
  %v454 = vrot.slane %v445, %v453
  %v455 = vlaneseq
  %v456 = vshrl.u32 %v455, 7
  %v457 = vsub.s32 2, %v456
  %v458 = vrot.slane %v445, %v457
  %v459 = vlaneseq
  %v460 = vshrl.u32 %v459, 7
  %v461 = vsub.s32 3, %v460
  %v462 = vrot.slane %v445, %v461
  %v467 = vmul.f32 %v440, %v450
  %v468 = vmul.f32 %v443, %v454
  %v469 = vmul.f32 %v442, %v458
  %v470 = vmul.f32 %v441, %v462
  %471 = vrot.lane.b32.xlu0 %v26, 12
  %v472 = vpop.permute.xlu0 %471
  %473 = vrot.lane.b32.xlu0 %v27, 12
  %v474 = vpop.permute.xlu0 %473
  %475 = vrot.lane.b32.xlu0 %v28, 12
  %v476 = vpop.permute.xlu0 %475
  %477 = vrot.lane.b32.xlu0 %v29, 12
  %v478 = vpop.permute.xlu0 %477
  %vm479 = vcmp.lt.s32.totalorder %v39, 12
  %v480 = vsel %vm479, %v476, %v478
  %v481 = vsel %vm479, %v474, %v476
  %v482 = vsel %vm479, %v472, %v474
  %v483 = vsel %vm479, %v478, %v472
  %s484 = scalar_lea.vmem %s1, 35
  %v485 = vld [vmem:[%s484] ss:$8 sm:$0xf]
  %v487 = vlaneseq
  %v488 = vshrl.u32 %v487, 7
  %v489 = vsub.s32 0, %v488
  %v490 = vrot.slane %v485, %v489
  %v491 = vlaneseq
  %v492 = vshrl.u32 %v491, 7
  %v493 = vsub.s32 1, %v492
  %v494 = vrot.slane %v485, %v493
  %v495 = vlaneseq
  %v496 = vshrl.u32 %v495, 7
  %v497 = vsub.s32 2, %v496
  %v498 = vrot.slane %v485, %v497
  %v499 = vlaneseq
  %v500 = vshrl.u32 %v499, 7
  %v501 = vsub.s32 3, %v500
  %v502 = vrot.slane %v485, %v501
  %v507 = vmul.f32 %v483, %v490
  %v508 = vmul.f32 %v482, %v494
  %v509 = vmul.f32 %v481, %v498
  %v510 = vmul.f32 %v480, %v502
  %511 = vrot.lane.b32.xlu0 %v26, 116
  %v512 = vpop.permute.xlu0 %511
  %513 = vrot.lane.b32.xlu0 %v27, 116
  %v514 = vpop.permute.xlu0 %513
  %515 = vrot.lane.b32.xlu0 %v28, 116
  %v516 = vpop.permute.xlu0 %515
  %517 = vrot.lane.b32.xlu0 %v29, 116
  %v518 = vpop.permute.xlu0 %517
  %vm519 = vcmp.lt.s32.totalorder %v39, 116
  %v520 = vsel %vm519, %v516, %v518
  %v521 = vsel %vm519, %v514, %v516
  %v522 = vsel %vm519, %v512, %v514
  %v523 = vsel %vm519, %v518, %v512
  %s524 = scalar_lea.vmem %s1, 36
  %v525 = vld [vmem:[%s524] ss:$8 sm:$0xf]
  %v527 = vlaneseq
  %v528 = vshrl.u32 %v527, 7
  %v529 = vsub.s32 0, %v528
  %v530 = vrot.slane %v525, %v529
  %v531 = vlaneseq
  %v532 = vshrl.u32 %v531, 7
  %v533 = vsub.s32 1, %v532
  %v534 = vrot.slane %v525, %v533
  %v535 = vlaneseq
  %v536 = vshrl.u32 %v535, 7
  %v537 = vsub.s32 2, %v536
  %v538 = vrot.slane %v525, %v537
  %v539 = vlaneseq
  %v540 = vshrl.u32 %v539, 7
  %v541 = vsub.s32 3, %v540
  %v542 = vrot.slane %v525, %v541
  %v547 = vmul.f32 %v522, %v530
  %v548 = vmul.f32 %v521, %v534
  %v549 = vmul.f32 %v520, %v538
  %v550 = vmul.f32 %v523, %v542
  %s551 = scalar_lea.vmem %s1, 37
  %v552 = vld [vmem:[%s551] ss:$8 sm:$0xf]
  %v554 = vlaneseq
  %v555 = vshrl.u32 %v554, 7
  %v556 = vsub.s32 0, %v555
  %v557 = vrot.slane %v552, %v556
  %v558 = vlaneseq
  %v559 = vshrl.u32 %v558, 7
  %v560 = vsub.s32 1, %v559
  %v561 = vrot.slane %v552, %v560
  %v562 = vlaneseq
  %v563 = vshrl.u32 %v562, 7
  %v564 = vsub.s32 2, %v563
  %v565 = vrot.slane %v552, %v564
  %v566 = vlaneseq
  %v567 = vshrl.u32 %v566, 7
  %v568 = vsub.s32 3, %v567
  %v569 = vrot.slane %v552, %v568
  %v574 = vmul.f32 %v361, %v557
  %v575 = vmul.f32 %v360, %v561
  %v576 = vmul.f32 %v363, %v565
  %v577 = vmul.f32 %v362, %v569
  %s578 = scalar_lea.vmem %s1, 38
  %v579 = vld [vmem:[%s578] ss:$8 sm:$0xf]
  %v581 = vlaneseq
  %v582 = vshrl.u32 %v581, 7
  %v583 = vsub.s32 0, %v582
  %v584 = vrot.slane %v579, %v583
  %v585 = vlaneseq
  %v586 = vshrl.u32 %v585, 7
  %v587 = vsub.s32 1, %v586
  %v588 = vrot.slane %v579, %v587
  %v589 = vlaneseq
  %v590 = vshrl.u32 %v589, 7
  %v591 = vsub.s32 2, %v590
  %v592 = vrot.slane %v579, %v591
  %v593 = vlaneseq
  %v594 = vshrl.u32 %v593, 7
  %v595 = vsub.s32 3, %v594
  %v596 = vrot.slane %v579, %v595
  %v601 = vmul.f32 %v401, %v584
  %v602 = vmul.f32 %v400, %v588
  %v603 = vmul.f32 %v403, %v592
  %v604 = vmul.f32 %v402, %v596
  %s605 = scalar_lea.vmem %s1, 39
  %v606 = vld [vmem:[%s605] ss:$8 sm:$0xf]
  %v608 = vlaneseq
  %v609 = vshrl.u32 %v608, 7
  %v610 = vsub.s32 0, %v609
  %v611 = vrot.slane %v606, %v610
  %v612 = vlaneseq
  %v613 = vshrl.u32 %v612, 7
  %v614 = vsub.s32 1, %v613
  %v615 = vrot.slane %v606, %v614
  %v616 = vlaneseq
  %v617 = vshrl.u32 %v616, 7
  %v618 = vsub.s32 2, %v617
  %v619 = vrot.slane %v606, %v618
  %v620 = vlaneseq
  %v621 = vshrl.u32 %v620, 7
  %v622 = vsub.s32 3, %v621
  %v623 = vrot.slane %v606, %v622
  %v628 = vmul.f32 %v441, %v611
  %v629 = vmul.f32 %v440, %v615
  %v630 = vmul.f32 %v443, %v619
  %v631 = vmul.f32 %v442, %v623
  %v632 = vld [vmem:[%s2] ss:$2 sm:$0xf]
  %v634 = vlaneseq
  %v635 = vshrl.u32 %v634, 7
  %v636 = vsub.s32 0, %v635
  %v637 = vrot.slane %v632, %v636
  %v638 = vlaneseq
  %v639 = vshrl.u32 %v638, 7
  %v640 = vsub.s32 1, %v639
  %v641 = vrot.slane %v632, %v640
  %v642 = vlaneseq
  %v643 = vshrl.u32 %v642, 7
  %v644 = vsub.s32 2, %v643
  %v645 = vrot.slane %v632, %v644
  %v646 = vlaneseq
  %v647 = vshrl.u32 %v646, 7
  %v648 = vsub.s32 3, %v647
  %v649 = vrot.slane %v632, %v648
  %v654 = vmul.f32 %v26, %v637
  %v655 = vmul.f32 %v27, %v641
  %v656 = vmul.f32 %v28, %v645
  %v657 = vmul.f32 %v29, %v649
  %v658 = vadd.f32 %v654, %v655
  %v659 = vadd.f32 %v658, %v656
  %v660 = vadd.f32 %v659, %v657
  %661 = vadd.xlane.f32.xlu0 %v660
  %v662 = vpop.xlane.xlu0 %661
  %v663 = vmul.f32 %v662, 0.00390625
  %v664 = vmul.f32 %v663, %v637
  %v665 = vmul.f32 %v663, %v641
  %v666 = vmul.f32 %v663, %v645
  %v667 = vmul.f32 %v663, %v649
  %s668 = scalar_lea.vmem %s2, 1
  %v669 = vld [vmem:[%s668] ss:$2 sm:$0xf]
  %v671 = vlaneseq
  %v672 = vshrl.u32 %v671, 7
  %v673 = vsub.s32 0, %v672
  %v674 = vrot.slane %v669, %v673
  %v675 = vlaneseq
  %v676 = vshrl.u32 %v675, 7
  %v677 = vsub.s32 1, %v676
  %v678 = vrot.slane %v669, %v677
  %v679 = vlaneseq
  %v680 = vshrl.u32 %v679, 7
  %v681 = vsub.s32 2, %v680
  %v682 = vrot.slane %v669, %v681
  %v683 = vlaneseq
  %v684 = vshrl.u32 %v683, 7
  %v685 = vsub.s32 3, %v684
  %v686 = vrot.slane %v669, %v685
  %v691 = vmul.f32 %v26, %v674
  %v692 = vmul.f32 %v27, %v678
  %v693 = vmul.f32 %v28, %v682
  %v694 = vmul.f32 %v29, %v686
  %v695 = vadd.f32 %v691, %v692
  %v696 = vadd.f32 %v695, %v693
  %v697 = vadd.f32 %v696, %v694
  %698 = vadd.xlane.f32.xlu0 %v697
  %v699 = vpop.xlane.xlu0 %698
  %v700 = vmul.f32 %v699, 0.00390625
  %v701 = vmul.f32 %v700, %v674
  %v702 = vmul.f32 %v700, %v678
  %v703 = vmul.f32 %v700, %v682
  %v704 = vmul.f32 %v700, %v686
  %v705 = vadd.f32 %v664, %v701
  %v706 = vadd.f32 %v665, %v702
  %v707 = vadd.f32 %v666, %v703
  %v708 = vadd.f32 %v667, %v704
  %v709 = vld [vmem:[%s3] sm:$0xff]
  %v710 = vld [vmem:[%s3 + $0x8] sm:$0xff]
  %v711 = vld [vmem:[%s3 + $0x10] sm:$0xff]
  %v712 = vld [vmem:[%s3 + $0x18] sm:$0xff]
  %v713 = vld [vmem:[%s3 + $0x20] sm:$0xff]
  %v714 = vld [vmem:[%s3 + $0x28] sm:$0xff]
  %v715 = vld [vmem:[%s3 + $0x30] sm:$0xff]
  %v716 = vld [vmem:[%s3 + $0x38] sm:$0xff]
  %v717 = vld [vmem:[%s3 + $0x40] sm:$0xff]
  %v718 = vld [vmem:[%s3 + $0x48] sm:$0xff]
  %v719 = vld [vmem:[%s4] sm:$0xff]
  %v720 = vld [vmem:[%s4 + $0x8] sm:$0xff]
  %v721 = vld [vmem:[%s4 + $0x10] sm:$0xff]
  %v722 = vld [vmem:[%s4 + $0x18] sm:$0xff]
  %v723 = vld [vmem:[%s4 + $0x20] sm:$0xff]
  %725 = vset.pattern.permute.xlu0 0
  %726 = vperm.xlu0 %725, %v719
  %v727 = vpop.permute.xlu0 %726
  %730 = vset.pattern.permute.xlu0 0
  %731 = vperm.xlu0 %730, %v720
  %v732 = vpop.permute.xlu0 %731
  %735 = vset.pattern.permute.xlu0 0
  %736 = vperm.xlu0 %735, %v721
  %v737 = vpop.permute.xlu0 %736
  %740 = vset.pattern.permute.xlu0 0
  %741 = vperm.xlu0 %740, %v722
  %v742 = vpop.permute.xlu0 %741
  %745 = vset.pattern.permute.xlu0 0
  %746 = vperm.xlu0 %745, %v723
  %v747 = vpop.permute.xlu0 %746
  %vm749 = vcmask 130048
  %v751 = vsel %vm749, %v710, 0
  %v754 = vsel %vm749, %v712, 0
  %v757 = vsel %vm749, %v714, 0
  %v760 = vsel %vm749, %v716, 0
  %v763 = vsel %vm749, %v718, 0
  %765 = vmatprep.subr.mxu0 %v602
  %766 = vmatpush1.msra.mxu0 %v601
  %767 = vmatprep.subr.mxu0 %v575
  %768 = vmatpush1.msra.mxu0 %v574
  %769 = vmatprep.subr.mxu0 %v548
  %770 = vmatpush1.msra.mxu0 %v547
  %771 = vmatprep.subr.mxu0 %v508
  %772 = vmatpush1.msra.mxu0 %v507
  %773 = vmatprep.subr.mxu0 %v468
  %774 = vmatpush1.msra.mxu0 %v467
  %775 = vmatprep.subr.mxu0 %v428
  %776 = vmatpush1.msra.mxu0 %v427
  %777 = vmatprep.subr.mxu0 %v388
  %778 = vmatpush1.msra.mxu0 %v387
  %779 = vmatprep.subr.mxu0 %v348
  %780 = vmatpush1.msra.mxu0 %v347
  %781 = vmatprep.subr.mxu0 %v308
  %782 = vmatpush1.msra.mxu0 %v307
  %783 = vmatprep.subr.mxu0 %v268
  %784 = vmatpush1.msra.mxu0 %v267
  %785 = vmatprep.subr.mxu0 %v228
  %786 = vmatpush1.msra.mxu0 %v227
  %787 = vmatprep.subr.mxu0 %v188
  %788 = vmatpush1.msra.mxu0 %v187
  %789 = vmatprep.subr.mxu0 %v148
  %790 = vmatpush1.msra.mxu0 %v147
  %791 = vmatprep.subr.mxu0 %v108
  %792 = vmatpush1.msra.mxu0 %v107
  %793 = vmatprep.subr.mxu0 %v68
  %794 = vmatpush1.msra.mxu0 %v67
  %795 = vmatprep.subr.mxu0 %v27
  %796 = vmatpush1.msra.mxu0 %v26
  %797 = vmatprep.subr.mxu0 0.0
  %798 = vmatpush2.msra.mxu0 0.0
  %799 = vmatprep.subr.mxu0 0.0
  %800 = vmatpush2.msra.mxu0 0.0
  %801 = vmatprep.subr.mxu0 0.0
  %802 = vmatpush2.msra.mxu0 0.0
  %803 = vmatprep.subr.mxu0 0.0
  %804 = vmatpush2.msra.mxu0 0.0
  %805 = vmatprep.subr.mxu0 0.0
  %806 = vmatpush2.msra.mxu0 0.0
  %807 = vmatprep.subr.mxu0 0.0
  %808 = vmatpush2.msra.mxu0 0.0
  %809 = vmatprep.subr.mxu0 0.0
  %810 = vmatpush2.msra.mxu0 0.0
  %811 = vmatprep.subr.mxu0 0.0
  %812 = vmatpush2.msra.mxu0 0.0
  %813 = vmatprep.subr.mxu0 0.0
  %814 = vmatpush2.msra.mxu0 0.0
  %815 = vmatprep.subr.mxu0 0.0
  %816 = vmatpush2.msra.mxu0 0.0
  %817 = vmatprep.subr.mxu0 0.0
  %818 = vmatpush2.msra.mxu0 0.0
  %819 = vmatprep.subr.mxu0 0.0
  %820 = vmatpush2.msra.mxu0 0.0
  %821 = vmatprep.subr.mxu0 0.0
  %822 = vmatpush2.msra.mxu0 0.0
  %823 = vmatprep.subr.mxu0 0.0
  %824 = vmatpush2.msra.mxu0 0.0
  %825 = vmatprep.subr.mxu0 %v706
  %826 = vmatpush2.msra.mxu0 %v705
  %827 = vmatprep.subr.mxu0 %v629
  %828 = vmatpush2.msra.mxu0 %v628
  %829 = vmatprep.mubr.f32.mxu0 %v751
  %830 = vmatmul.mubr.f32.gmra.mxu0 %v709
  %v831 = vpop.f32.mrf.mxu0
  %v832 = vadd.f32 %v727, %v831
  %v833 = vpop.f32.mrf.mxu0
  %v834 = vadd.f32 %v727, %v833
  %835 = vmatprep.mubr.f32.mxu0 %v754
  %836 = vmatmul.mubr.f32.gmra.mxu0 %v711
  %v837 = vpop.f32.mrf.mxu0
  %v838 = vadd.f32 %v732, %v837
  %v839 = vpop.f32.mrf.mxu0
  %v840 = vadd.f32 %v732, %v839
  %841 = vmatprep.mubr.f32.mxu0 %v757
  %842 = vmatmul.mubr.f32.gmra.mxu0 %v713
  %v843 = vpop.f32.mrf.mxu0
  %v844 = vadd.f32 %v737, %v843
  %v845 = vpop.f32.mrf.mxu0
  %v846 = vadd.f32 %v737, %v845
  %847 = vmatprep.mubr.f32.mxu0 %v760
  %848 = vmatmul.mubr.f32.gmra.mxu0 %v715
  %v849 = vpop.f32.mrf.mxu0
  %v850 = vadd.f32 %v742, %v849
  %v851 = vpop.f32.mrf.mxu0
  %v852 = vadd.f32 %v742, %v851
  %853 = vmatprep.mubr.f32.mxu0 %v763
  %854 = vmatmul.mubr.f32.gmra.mxu0 %v717
  %v855 = vpop.f32.mrf.mxu0
  %v856 = vadd.f32 %v747, %v855
  %v857 = vpop.f32.mrf.mxu0
  %v858 = vadd.f32 %v747, %v857
  %859 = vdwg.mxu0
  %860 = vmatprep.subr.mxu0 %v604
  %861 = vmatpush1.msra.mxu0 %v603
  %862 = vmatprep.subr.mxu0 %v577
  %863 = vmatpush1.msra.mxu0 %v576
  %864 = vmatprep.subr.mxu0 %v550
  %865 = vmatpush1.msra.mxu0 %v549
  %866 = vmatprep.subr.mxu0 %v510
  %867 = vmatpush1.msra.mxu0 %v509
  %868 = vmatprep.subr.mxu0 %v470
  %869 = vmatpush1.msra.mxu0 %v469
  %870 = vmatprep.subr.mxu0 %v430
  %871 = vmatpush1.msra.mxu0 %v429
  %872 = vmatprep.subr.mxu0 %v390
  %873 = vmatpush1.msra.mxu0 %v389
  %874 = vmatprep.subr.mxu0 %v350
  %875 = vmatpush1.msra.mxu0 %v349
  %876 = vmatprep.subr.mxu0 %v310
  %877 = vmatpush1.msra.mxu0 %v309
  %878 = vmatprep.subr.mxu0 %v270
  %879 = vmatpush1.msra.mxu0 %v269
  %880 = vmatprep.subr.mxu0 %v230
  %881 = vmatpush1.msra.mxu0 %v229
  %882 = vmatprep.subr.mxu0 %v190
  %883 = vmatpush1.msra.mxu0 %v189
  %884 = vmatprep.subr.mxu0 %v150
  %885 = vmatpush1.msra.mxu0 %v149
  %886 = vmatprep.subr.mxu0 %v110
  %887 = vmatpush1.msra.mxu0 %v109
  %888 = vmatprep.subr.mxu0 %v70
  %889 = vmatpush1.msra.mxu0 %v69
  %890 = vmatprep.subr.mxu0 %v29
  %891 = vmatpush1.msra.mxu0 %v28
  %892 = vmatprep.subr.mxu0 0.0
  %893 = vmatpush2.msra.mxu0 0.0
  %894 = vmatprep.subr.mxu0 0.0
  %895 = vmatpush2.msra.mxu0 0.0
  %896 = vmatprep.subr.mxu0 0.0
  %897 = vmatpush2.msra.mxu0 0.0
  %898 = vmatprep.subr.mxu0 0.0
  %899 = vmatpush2.msra.mxu0 0.0
  %900 = vmatprep.subr.mxu0 0.0
  %901 = vmatpush2.msra.mxu0 0.0
  %902 = vmatprep.subr.mxu0 0.0
  %903 = vmatpush2.msra.mxu0 0.0
  %904 = vmatprep.subr.mxu0 0.0
  %905 = vmatpush2.msra.mxu0 0.0
  %906 = vmatprep.subr.mxu0 0.0
  %907 = vmatpush2.msra.mxu0 0.0
  %908 = vmatprep.subr.mxu0 0.0
  %909 = vmatpush2.msra.mxu0 0.0
  %910 = vmatprep.subr.mxu0 0.0
  %911 = vmatpush2.msra.mxu0 0.0
  %912 = vmatprep.subr.mxu0 0.0
  %913 = vmatpush2.msra.mxu0 0.0
  %914 = vmatprep.subr.mxu0 0.0
  %915 = vmatpush2.msra.mxu0 0.0
  %916 = vmatprep.subr.mxu0 0.0
  %917 = vmatpush2.msra.mxu0 0.0
  %918 = vmatprep.subr.mxu0 0.0
  %919 = vmatpush2.msra.mxu0 0.0
  %920 = vmatprep.subr.mxu0 %v708
  %921 = vmatpush2.msra.mxu0 %v707
  %922 = vmatprep.subr.mxu0 %v631
  %923 = vmatpush2.msra.mxu0 %v630
  %924 = vmatprep.mubr.f32.mxu0 %v751
  %925 = vmatmul.mubr.f32.gmra.mxu0 %v709
  %v926 = vpop.f32.mrf.mxu0
  %v927 = vadd.f32 %v727, %v926
  %v928 = vpop.f32.mrf.mxu0
  %v929 = vadd.f32 %v727, %v928
  %930 = vmatprep.mubr.f32.mxu0 %v754
  %931 = vmatmul.mubr.f32.gmra.mxu0 %v711
  %v932 = vpop.f32.mrf.mxu0
  %v933 = vadd.f32 %v732, %v932
  %v934 = vpop.f32.mrf.mxu0
  %v935 = vadd.f32 %v732, %v934
  %936 = vmatprep.mubr.f32.mxu0 %v757
  %937 = vmatmul.mubr.f32.gmra.mxu0 %v713
  %v938 = vpop.f32.mrf.mxu0
  %v939 = vadd.f32 %v737, %v938
  %v940 = vpop.f32.mrf.mxu0
  %v941 = vadd.f32 %v737, %v940
  %942 = vmatprep.mubr.f32.mxu0 %v760
  %943 = vmatmul.mubr.f32.gmra.mxu0 %v715
  %v944 = vpop.f32.mrf.mxu0
  %v945 = vadd.f32 %v742, %v944
  %v946 = vpop.f32.mrf.mxu0
  %v947 = vadd.f32 %v742, %v946
  %948 = vmatprep.mubr.f32.mxu0 %v763
  %949 = vmatmul.mubr.f32.gmra.mxu0 %v717
  %v950 = vpop.f32.mrf.mxu0
  %v951 = vadd.f32 %v747, %v950
  %v952 = vpop.f32.mrf.mxu0
  %v953 = vadd.f32 %v747, %v952
  %954 = vdwg.mxu0
  %v955 = vmax.f32 %v832, 0.0
  %v956 = vmax.f32 %v834, 0.0
  %v957 = vmax.f32 %v927, 0.0
  %v958 = vmax.f32 %v929, 0.0
  %v959 = vmax.f32 %v838, 0.0
  %v960 = vmax.f32 %v840, 0.0
  %v961 = vmax.f32 %v933, 0.0
  %v962 = vmax.f32 %v935, 0.0
  %v963 = vmax.f32 %v844, 0.0
  %v964 = vmax.f32 %v846, 0.0
  %v965 = vmax.f32 %v939, 0.0
  %v966 = vmax.f32 %v941, 0.0
  %v967 = vmax.f32 %v850, 0.0
  %v968 = vmax.f32 %v852, 0.0
  %v969 = vmax.f32 %v945, 0.0
  %v970 = vmax.f32 %v947, 0.0
  %v971 = vmax.f32 %v856, 0.0
  %v972 = vmax.f32 %v858, 0.0
  %v973 = vmax.f32 %v951, 0.0
  %v974 = vmax.f32 %v953, 0.0
  %v975 = vld [vmem:[%s5] sm:$0xff]
  %v976 = vld [vmem:[%s6] sm:$0xff]
  %978 = vset.pattern.permute.xlu0 0
  %979 = vperm.xlu0 %978, %v976
  %v980 = vpop.permute.xlu0 %979
  %vm982 = vcmask 326656
  %v984 = vsel %vm982, %v975, 0
  %986 = vmatprep.subr.mxu0 0.0
  %987 = vmatpush1.msra.mxu0 0.0
  %988 = vmatprep.subr.mxu0 0.0
  %989 = vmatpush1.msra.mxu0 0.0
  %990 = vmatprep.subr.mxu0 0.0
  %991 = vmatpush1.msra.mxu0 0.0
  %992 = vmatprep.subr.mxu0 0.0
  %993 = vmatpush1.msra.mxu0 0.0
  %994 = vmatprep.subr.mxu0 0.0
  %995 = vmatpush1.msra.mxu0 0.0
  %996 = vmatprep.subr.mxu0 0.0
  %997 = vmatpush1.msra.mxu0 0.0
  %998 = vmatprep.subr.mxu0 0.0
  %999 = vmatpush1.msra.mxu0 0.0
  %1000 = vmatprep.subr.mxu0 0.0
  %1001 = vmatpush1.msra.mxu0 0.0
  %1002 = vmatprep.subr.mxu0 0.0
  %1003 = vmatpush1.msra.mxu0 0.0
  %1004 = vmatprep.subr.mxu0 0.0
  %1005 = vmatpush1.msra.mxu0 0.0
  %1006 = vmatprep.subr.mxu0 0.0
  %1007 = vmatpush1.msra.mxu0 0.0
  %1008 = vmatprep.subr.mxu0 %v972
  %1009 = vmatpush1.msra.mxu0 %v971
  %1010 = vmatprep.subr.mxu0 %v968
  %1011 = vmatpush1.msra.mxu0 %v967
  %1012 = vmatprep.subr.mxu0 %v964
  %1013 = vmatpush1.msra.mxu0 %v963
  %1014 = vmatprep.subr.mxu0 %v960
  %1015 = vmatpush1.msra.mxu0 %v959
  %1016 = vmatprep.subr.mxu0 %v956
  %1017 = vmatpush1.msra.mxu0 %v955
  %1018 = vmatprep.subr.mxu0 0.0
  %1019 = vmatpush2.msra.mxu0 0.0
  %1020 = vmatprep.subr.mxu0 0.0
  %1021 = vmatpush2.msra.mxu0 0.0
  %1022 = vmatprep.subr.mxu0 0.0
  %1023 = vmatpush2.msra.mxu0 0.0
  %1024 = vmatprep.subr.mxu0 0.0
  %1025 = vmatpush2.msra.mxu0 0.0
  %1026 = vmatprep.subr.mxu0 0.0
  %1027 = vmatpush2.msra.mxu0 0.0
  %1028 = vmatprep.subr.mxu0 0.0
  %1029 = vmatpush2.msra.mxu0 0.0
  %1030 = vmatprep.subr.mxu0 0.0
  %1031 = vmatpush2.msra.mxu0 0.0
  %1032 = vmatprep.subr.mxu0 0.0
  %1033 = vmatpush2.msra.mxu0 0.0
  %1034 = vmatprep.subr.mxu0 0.0
  %1035 = vmatpush2.msra.mxu0 0.0
  %1036 = vmatprep.subr.mxu0 0.0
  %1037 = vmatpush2.msra.mxu0 0.0
  %1038 = vmatprep.subr.mxu0 0.0
  %1039 = vmatpush2.msra.mxu0 0.0
  %1040 = vmatprep.subr.mxu0 0.0
  %1041 = vmatpush2.msra.mxu0 0.0
  %1042 = vmatprep.subr.mxu0 0.0
  %1043 = vmatpush2.msra.mxu0 0.0
  %1044 = vmatprep.subr.mxu0 0.0
  %1045 = vmatpush2.msra.mxu0 0.0
  %1046 = vmatprep.subr.mxu0 0.0
  %1047 = vmatpush2.msra.mxu0 0.0
  %1048 = vmatprep.subr.mxu0 0.0
  %1049 = vmatpush2.msra.mxu0 0.0
  %1050 = vmatprep.mubr.f32.mxu0 0.0
  %1051 = vmatmul.mubr.f32.gmra.mxu0 %v984
  %v1052 = vpop.f32.mrf.mxu0
  %v1053 = vadd.f32 %v980, %v1052
  %v1054 = vpop.f32.mrf.mxu0
  %v1055 = vadd.f32 %v980, %v1054
  %1056 = vdwg.mxu0
  %1057 = vmatprep.subr.mxu0 0.0
  %1058 = vmatpush1.msra.mxu0 0.0
  %1059 = vmatprep.subr.mxu0 0.0
  %1060 = vmatpush1.msra.mxu0 0.0
  %1061 = vmatprep.subr.mxu0 0.0
  %1062 = vmatpush1.msra.mxu0 0.0
  %1063 = vmatprep.subr.mxu0 0.0
  %1064 = vmatpush1.msra.mxu0 0.0
  %1065 = vmatprep.subr.mxu0 0.0
  %1066 = vmatpush1.msra.mxu0 0.0
  %1067 = vmatprep.subr.mxu0 0.0
  %1068 = vmatpush1.msra.mxu0 0.0
  %1069 = vmatprep.subr.mxu0 0.0
  %1070 = vmatpush1.msra.mxu0 0.0
  %1071 = vmatprep.subr.mxu0 0.0
  %1072 = vmatpush1.msra.mxu0 0.0
  %1073 = vmatprep.subr.mxu0 0.0
  %1074 = vmatpush1.msra.mxu0 0.0
  %1075 = vmatprep.subr.mxu0 0.0
  %1076 = vmatpush1.msra.mxu0 0.0
  %1077 = vmatprep.subr.mxu0 0.0
  %1078 = vmatpush1.msra.mxu0 0.0
  %1079 = vmatprep.subr.mxu0 %v974
  %1080 = vmatpush1.msra.mxu0 %v973
  %1081 = vmatprep.subr.mxu0 %v970
  %1082 = vmatpush1.msra.mxu0 %v969
  %1083 = vmatprep.subr.mxu0 %v966
  %1084 = vmatpush1.msra.mxu0 %v965
  %1085 = vmatprep.subr.mxu0 %v962
  %1086 = vmatpush1.msra.mxu0 %v961
  %1087 = vmatprep.subr.mxu0 %v958
  %1088 = vmatpush1.msra.mxu0 %v957
  %1089 = vmatprep.subr.mxu0 0.0
  %1090 = vmatpush2.msra.mxu0 0.0
  %1091 = vmatprep.subr.mxu0 0.0
  %1092 = vmatpush2.msra.mxu0 0.0
  %1093 = vmatprep.subr.mxu0 0.0
  %1094 = vmatpush2.msra.mxu0 0.0
  %1095 = vmatprep.subr.mxu0 0.0
  %1096 = vmatpush2.msra.mxu0 0.0
  %1097 = vmatprep.subr.mxu0 0.0
  %1098 = vmatpush2.msra.mxu0 0.0
  %1099 = vmatprep.subr.mxu0 0.0
  %1100 = vmatpush2.msra.mxu0 0.0
  %1101 = vmatprep.subr.mxu0 0.0
  %1102 = vmatpush2.msra.mxu0 0.0
  %1103 = vmatprep.subr.mxu0 0.0
  %1104 = vmatpush2.msra.mxu0 0.0
  %1105 = vmatprep.subr.mxu0 0.0
  %1106 = vmatpush2.msra.mxu0 0.0
  %1107 = vmatprep.subr.mxu0 0.0
  %1108 = vmatpush2.msra.mxu0 0.0
  %1109 = vmatprep.subr.mxu0 0.0
  %1110 = vmatpush2.msra.mxu0 0.0
  %1111 = vmatprep.subr.mxu0 0.0
  %1112 = vmatpush2.msra.mxu0 0.0
  %1113 = vmatprep.subr.mxu0 0.0
  %1114 = vmatpush2.msra.mxu0 0.0
  %1115 = vmatprep.subr.mxu0 0.0
  %1116 = vmatpush2.msra.mxu0 0.0
  %1117 = vmatprep.subr.mxu0 0.0
  %1118 = vmatpush2.msra.mxu0 0.0
  %1119 = vmatprep.subr.mxu0 0.0
  %1120 = vmatpush2.msra.mxu0 0.0
  %1121 = vmatprep.mubr.f32.mxu0 0.0
  %1122 = vmatmul.mubr.f32.gmra.mxu0 %v984
  %v1123 = vpop.f32.mrf.mxu0
  %v1124 = vadd.f32 %v980, %v1123
  %v1125 = vpop.f32.mrf.mxu0
  %v1126 = vadd.f32 %v980, %v1125
  %1127 = vdwg.mxu0
  %v1128 = vmax.f32 %v1053, 0.0
  %v1129 = vmax.f32 %v1055, 0.0
  %v1130 = vmax.f32 %v1124, 0.0
  %v1131 = vmax.f32 %v1126, 0.0
  %1132 = vst [vmem:[%s7] sm:$0xff] %v1128
  %1133 = vst [vmem:[%s7 + $0x8] sm:$0xff] %v1129
  %1134 = vst [vmem:[%s7 + $0x10] sm:$0xff] %v1130
  %1135 = vst [vmem:[%s7 + $0x18] sm:$0xff] %v1131
  // Predicated region
  $region30: #{aspp_forward.1} parent=0 // pred_check
    _
  $region31: #{aspp_forward.1} parent=0 // pred_check_branch
    %1137 = sbr.rel (0) target = $region33
  $region32: #{aspp_forward.1} parent=0 // pred_region
    _
  $region33: #{aspp_forward.1} parent=0 // pred_fallthru
    _
  // Predicated region
  $region34: #{aspp_forward.1} parent=0 // pred_check
    _
  $region35: #{aspp_forward.1} parent=0 // pred_check_branch
    %1139 = sbr.rel (0) target = $region37
  $region36: #{aspp_forward.1} parent=0 // pred_region
    _
  $region37: #{aspp_forward.1} parent=0 // pred_fallthru
    _

</llo_original>
